<compile_context>
chip_gen: v6e
topology: v6e:2x2x1
jax: 0.10.0
libtpu: 0.0.40
codegen_flags: <defaults>
</compile_context>

<pallas_src>
import functools

import jax
import jax.numpy as jnp
from jax import lax
from jax.experimental import pallas as pl
from jax.experimental.pallas import tpu as pltpu


def _round_up(x, m):
    return (x + m - 1) // m * m


# ----------------------------------------------------------------------------
# Fused res_conv Pallas kernel
# ----------------------------------------------------------------------------
def _res_conv_kernel(x_ref, w1_ref, s1_ref, w2_ref, s2_ref, w3_ref, s3_ref,
                     mask_ref, o_ref, act_ref, *, H, W, cout, match_short):
    """One image per grid step.

    x_ref:   (Cin_p, Spad)   bf16  padded input, flat lanes = hp*(W+2)+wp
    w1_ref:  (M1, 9*Cin_p)   bf16  conv1 weights (+ folded 1x1 shortcut rows)
    s1_ref:  (M1, 1)         f32   folded bias+BN shifts for conv1 (+shortcut)
    w2/w3:   (Cout, 9*Cact)  bf16  conv2/conv3 weights (BN folded)
    s2/s3:   (Cout, 1)       f32
    mask_ref:(1, Sout)       f32   1.0 on real columns, 0.0 on the 2 junk cols
    o_ref:   (Cout, Sout)    f32   Sout = H*(W+2); junk cols dropped by wrapper
    act_ref: (Cact, Spad)    f32   padded inter-conv activation scratch
    """
    Wp = W + 2
    Sout = H * Wp
    center = Wp + 1                      # flat offset of the (dh=1, dw=1) tap
    cact, Spad = act_ref.shape

    # Keep the never-written border lanes of the activation scratch zero so
    # the implicit SAME padding is correct on every grid step (no full-buffer
    # re-zero; safe even if the parallel grid axis is split across cores).
    act_ref[:, :center] = jnp.zeros((cact, center), jnp.float32)
    act_ref[:, center + Sout:] = jnp.zeros((cact, Spad - center - Sout),
                                           jnp.float32)

    mask = mask_ref[...]                 # (1, Sout)

    def taps(src_ref):
        # Transposed im2col: every tap is a pure lane-offset slice of src.
        return jnp.concatenate(
            [src_ref[:, (k // 3) * Wp + (k % 3):
                        (k // 3) * Wp + (k % 3) + Sout] for k in range(9)],
            axis=0)                                       # (9*C, Sout)

    def conv(src_ref, w_ref, s_ref):
        slab = taps(src_ref).astype(jnp.bfloat16)
        acc = jnp.dot(w_ref[...], slab,
                      preferred_element_type=jnp.float32)  # (M, Sout) f32
        return acc + s_ref[...]

    # ---- conv1 (+ folded 1x1 shortcut as extra output rows) -----------------
    y = conv(x_ref, w1_ref, s1_ref)
    if match_short:
        ident = y[cout:, :]              # shortcut branch (1x1 conv + BN)
        y = y[:cout, :]
    else:
        # TODO(synk): identity path is bf16-rounded (input ref is bf16).
        ident = x_ref[:cout, center:center + Sout].astype(jnp.float32)
    act_ref[:cout, center:center + Sout] = jnp.maximum(y, 0.0) * mask

    # ---- conv2 ---------------------------------------------------------------
    y = conv(act_ref, w2_ref, s2_ref)
    act_ref[:cout, center:center + Sout] = jnp.maximum(y, 0.0) * mask

    # ---- conv3 + residual add + final ReLU, single dense output store -------
    y = conv(act_ref, w3_ref, s3_ref)
    o_ref[...] = jnp.maximum(y + ident, 0.0)


# ----------------------------------------------------------------------------
# Parameter folding helpers
# ----------------------------------------------------------------------------
def _fold_conv_bn(w_hwio, bias, bn, eps=1e-5):
    """BN(conv(x)+b) == conv_{w*scale}(x) + ((b-mean)*scale + beta)."""
    scale = bn["gamma"] * lax.rsqrt(bn["var"] + eps)
    w = w_hwio * scale                                   # broadcast over O axis
    shift = (bias - bn["mean"]) * scale + bn["beta"]
    return w, shift


# ----------------------------------------------------------------------------
# up.forward wrapper (upsample / pad / concat in JAX, res_conv fused in Pallas)
# ----------------------------------------------------------------------------
def _interp_matrix(in_size, out_size):
    """Row-stochastic bilinear interp matrix, align_corners=True (gather-free)."""
    if in_size == 1:
        return jnp.ones((out_size, 1), jnp.float32)
    pos = jnp.arange(out_size, dtype=jnp.float32) * (in_size - 1) / (out_size - 1)
    lo = jnp.clip(jnp.floor(pos), 0, in_size - 2)
    frac = pos - lo
    lo = lo.astype(jnp.int32)
    lo_oh = jax.nn.one_hot(lo, in_size, dtype=jnp.float32)
    hi_oh = jax.nn.one_hot(lo + 1, in_size, dtype=jnp.float32)
    return lo_oh * (1.0 - frac)[:, None] + hi_oh * frac[:, None]   # (out, in)


def _upsample2x_align_corners(x_nchw):
    """nn.Upsample(scale_factor=2, mode='bilinear', align_corners=True)."""
    _, _, h, w = x_nchw.shape
    mh = _interp_matrix(h, 2 * h)
    mw = _interp_matrix(w, 2 * w)
    return jnp.einsum("Hh,Ww,nchw->ncHW", mh, mw, x_nchw)


def up_forward(x1_nchw, x2_nchw, params):
    x1 = x1_nchw.astype(jnp.float32)
    x2 = x2_nchw.astype(jnp.float32)
    n, c2, H, W = x2.shape
    c1 = x1.shape[1]
    cin = c1 + c2
    cout = params["w1"].shape[-1]
    match_short = "ws" in params

    # Bilinear 2x upsample as two small fixed matmuls (no activation gathers).
    x1 = _upsample2x_align_corners(x1)
    dy = H - x1.shape[2]
    dx = W - x1.shape[3]

    # Layout constants: flattened padded spatial on the lane axis.
    Wp = W + 2
    S = (H + 2) * Wp                      # padded spatial size
    Sout = H * Wp                         # output columns (2 junk per row)
    Spad = _round_up(S + 2, 128)          # lane allocation (taps read to S+1)
    cin_p = _round_up(cin, 16)            # bf16 sublane tile alignment
    cact = _round_up(cout, 8)             # f32 sublane tile alignment

    # Fold the F.pad alignment pad and the conv SAME pad into one pad each.
    x1p = jnp.pad(x1, ((0, 0), (0, 0),
                       (1 + dy // 2, 1 + dy - dy // 2),
                       (1 + dx // 2, 1 + dx - dx // 2)))
    x2p = jnp.pad(x2, ((0, 0), (0, 0), (1, 1), (1, 1)))
    x = jnp.concatenate([x2p, x1p], axis=1)              # (n, cin, H+2, W+2)
    x = x.reshape(n, cin, S)
    x = jnp.pad(x, ((0, 0), (0, cin_p - cin), (0, Spad - S)))
    x = x.astype(jnp.bfloat16)

    # Fold conv bias + BN, build transposed-im2col weight matrices
    # (row = output channel, column = tap*c_pad + input channel).
    def prep3x3(w, b, bn, c_real, c_pad):
        wf, sh = _fold_conv_bn(w, b, bn)                 # (3,3,c_real,cout)
        wf = jnp.pad(wf, ((0, 0), (0, 0), (0, c_pad - c_real), (0, 0)))
        wm = jnp.transpose(wf, (3, 0, 1, 2)).reshape(cout, 9 * c_pad)
        return wm, sh

    w1m, s1 = prep3x3(params["w1"], params["b1"], params["bn1"], cin, cin_p)
    w2m, s2 = prep3x3(params["w2"], params["b2"], params["bn2"], cout, cact)
    w3m, s3 = prep3x3(params["w3"], params["b3"], params["bn3"], cout, cact)

    if match_short:
        wsf, ss = _fold_conv_bn(params["ws"], jnp.zeros((cout,), jnp.float32),
                                params["bns"])
        # Embed the 1x1 shortcut at the center tap (k=4) as extra output rows.
        wsm = jnp.zeros((cout, 9 * cin_p), jnp.float32)
        wsm = wsm.at[:, 4 * cin_p:4 * cin_p + cin].set(
            wsf.reshape(cin, cout).T)
        w1m = jnp.concatenate([w1m, wsm], axis=0)        # (2*cout, 9*cin_p)
        s1 = jnp.concatenate([s1, ss], axis=0)

    w1m = w1m.astype(jnp.bfloat16)
    w2m = w2m.astype(jnp.bfloat16)
    w3m = w3m.astype(jnp.bfloat16)
    s1 = s1.reshape(-1, 1).astype(jnp.float32)
    s2 = s2.reshape(-1, 1).astype(jnp.float32)
    s3 = s3.reshape(-1, 1).astype(jnp.float32)

    # Valid-column mask: each (W+2)-wide output row carries 2 junk columns.
    mask = ((jnp.arange(Sout) % Wp) < W).astype(jnp.float32).reshape(1, Sout)

    m1 = 2 * cout if match_short else cout
    kernel = functools.partial(_res_conv_kernel, H=H, W=W, cout=cout,
                               match_short=match_short)

    out = pl.pallas_call(
        kernel,
        out_shape=jax.ShapeDtypeStruct((n, cout, Sout), jnp.float32),
        grid=(n,),
        in_specs=[
            pl.BlockSpec((None, cin_p, Spad), lambda i: (i, 0, 0)),
            pl.BlockSpec((m1, 9 * cin_p), lambda i: (0, 0)),
            pl.BlockSpec((m1, 1), lambda i: (0, 0)),
            pl.BlockSpec((cout, 9 * cact), lambda i: (0, 0)),
            pl.BlockSpec((cout, 1), lambda i: (0, 0)),
            pl.BlockSpec((cout, 9 * cact), lambda i: (0, 0)),
            pl.BlockSpec((cout, 1), lambda i: (0, 0)),
            pl.BlockSpec((1, Sout), lambda i: (0, 0)),
        ],
        out_specs=pl.BlockSpec((None, cout, Sout), lambda i: (i, 0, 0)),
        scratch_shapes=[pltpu.VMEM((cact, Spad), jnp.float32)],
        compiler_params=pltpu.CompilerParams(
            dimension_semantics=("parallel",)),
    )(x, w1m, s1, w2m, s2, w3m, s3, mask)

    # (n, cout, H, W+2) -> drop the 2 junk columns -> already NCHW.
    return out.reshape(n, cout, H, Wp)[..., :W]


# ----------------------------------------------------------------------------
# Parameters (conv: PyTorch default init; BN: randomized to exercise folding)
# ----------------------------------------------------------------------------
def init_up_params(key, in_ch, out_ch):
    keys = iter(jax.random.split(key, 23))
    nxt = lambda: next(keys)

    def conv_init(cin, cout, ksize):
        bound = (cin * ksize * ksize) ** -0.5
        w = jax.random.uniform(nxt(), (ksize, ksize, cin, cout), jnp.float32,
                               -bound, bound)                         # HWIO
        b = jax.random.uniform(nxt(), (cout,), jnp.float32, -bound, bound)
        return w, b

    def bn_init(c):
        return dict(
            gamma=jax.random.uniform(nxt(), (c,), jnp.float32, 0.8, 1.2),
            beta=jax.random.uniform(nxt(), (c,), jnp.float32, -0.1, 0.1),
            mean=0.1 * jax.random.normal(nxt(), (c,), jnp.float32),
            var=jax.random.uniform(nxt(), (c,), jnp.float32, 0.8, 1.2),
        )

    w1, b1 = conv_init(in_ch, out_ch, 3)
    w2, b2 = conv_init(out_ch, out_ch, 3)
    w3, b3 = conv_init(out_ch, out_ch, 3)
    params = dict(w1=w1, b1=b1, bn1=bn_init(out_ch),
                  w2=w2, b2=b2, bn2=bn_init(out_ch),
                  w3=w3, b3=b3, bn3=bn_init(out_ch))
    if in_ch != out_ch:                          # match_short branch
        bound = in_ch ** -0.5
        params["ws"] = jax.random.uniform(nxt(), (1, 1, in_ch, out_ch),
                                          jnp.float32, -bound, bound)
        params["bns"] = bn_init(out_ch)
    return params


# ----------------------------------------------------------------------------
# Pure-JAX reference (f32, HIGHEST precision) for correctness checking
# ----------------------------------------------------------------------------
def _reference_up_forward(x1, x2, params, eps=1e-5):
    x1 = x1.astype(jnp.float32)
    x2 = x2.astype(jnp.float32)
    x1 = _upsample2x_align_corners(x1)
    dy = x2.shape[2] - x1.shape[2]
    dx = x2.shape[3] - x1.shape[3]
    x1 = jnp.pad(x1, ((0, 0), (0, 0), (dy // 2, dy - dy // 2),
                      (dx // 2, dx - dx // 2)))
    x = jnp.concatenate([x2, x1], axis=1)        # torch.cat([x2, x1], dim=1)

    def conv_bn(h, wgt, b, bn, relu):
        y = lax.conv_general_dilated(
            h, wgt, window_strides=(1, 1), padding="SAME",
            dimension_numbers=("NCHW", "HWIO", "NCHW"),
            precision=lax.Precision.HIGHEST)
        if b is not None:
            y = y + b[None, :, None, None]
        scale = bn["gamma"] / jnp.sqrt(bn["var"] + eps)
        y = ((y - bn["mean"][None, :, None, None]) * scale[None, :, None, None]
             + bn["beta"][None, :, None, None])
        return jnp.maximum(y, 0.0) if relu else y

    h1 = conv_bn(x, params["w1"], params["b1"], params["bn1"], True)
    h2 = conv_bn(h1, params["w2"], params["b2"], params["bn2"], True)
    h3 = conv_bn(h2, params["w3"], params["b3"], params["bn3"], False)
    ident = (conv_bn(x, params["ws"], None, params["bns"], False)
             if "ws" in params else x)
    return jnp.maximum(h3 + ident, 0.0)


if __name__ == "__main__":
    key = jax.random.PRNGKey(0)
    k1, k2, kp = jax.random.split(key, 3)

    n, ch_half, out_ch = 2, 8, 8          # concat in_ch = 2 * ch_half = 16
    H = W = 16                            # x2 spatial; x1 is H/2 x W/2
    x1 = jax.random.normal(k1, (n, ch_half, H // 2, W // 2), jnp.float32)
    x2 = jax.random.normal(k2, (n, ch_half, H, W), jnp.float32)
    params = init_up_params(kp, in_ch=2 * ch_half, out_ch=out_ch)

    fwd = jax.jit(up_forward)
    out = jax.block_until_ready(fwd(x1, x2, params))
    ref = _reference_up_forward(x1, x2, params)

    assert out.shape == (n, out_ch, H, W), out.shape
    assert bool(jnp.allclose(out, ref, atol=5e-2, rtol=5e-2)), \
        float(jnp.max(jnp.abs(out - ref)))
    print("KERNEL_OK")
</pallas_src>

<mosaic_0001>
module attributes {stable_mosaic.version = 11 : i64} {
  func.func @_res_conv_kernel(%arg0: i32, %arg1: memref<1x16x384xbf16, #tpu.memory_space<vmem>>, %arg2: memref<16x144xbf16, #tpu.memory_space<vmem>>, %arg3: memref<16x1xf32, #tpu.memory_space<vmem>>, %arg4: memref<8x72xbf16, #tpu.memory_space<vmem>>, %arg5: memref<8x1xf32, #tpu.memory_space<vmem>>, %arg6: memref<8x72xbf16, #tpu.memory_space<vmem>>, %arg7: memref<8x1xf32, #tpu.memory_space<vmem>>, %arg8: memref<1x288xf32, #tpu.memory_space<vmem>>, %arg9: memref<1x8x288xf32, #tpu.memory_space<vmem>>, %arg10: memref<8x384xf32, #tpu.memory_space<vmem>>) attributes {dimension_semantics = [#tpu.dimension_semantics<parallel>], iteration_bounds = array<i64: 2>, scalar_prefetch = 0 : i64, scratch_operands = 1 : i64, tpu.core_type = #tpu.core_type<tc>, window_params = [{transform_indices = @transform_0, window_bounds = array<i64: 1, 16, 384>}, {pipeline_mode = #tpu.pipeline_mode<synchronous>, transform_indices = @transform_1, window_bounds = array<i64: 16, 144>}, {pipeline_mode = #tpu.pipeline_mode<synchronous>, transform_indices = @transform_2, window_bounds = array<i64: 16, 1>}, {pipeline_mode = #tpu.pipeline_mode<synchronous>, transform_indices = @transform_3, window_bounds = array<i64: 8, 72>}, {pipeline_mode = #tpu.pipeline_mode<synchronous>, transform_indices = @transform_4, window_bounds = array<i64: 8, 1>}, {pipeline_mode = #tpu.pipeline_mode<synchronous>, transform_indices = @transform_5, window_bounds = array<i64: 8, 72>}, {pipeline_mode = #tpu.pipeline_mode<synchronous>, transform_indices = @transform_6, window_bounds = array<i64: 8, 1>}, {pipeline_mode = #tpu.pipeline_mode<synchronous>, transform_indices = @transform_7, window_bounds = array<i64: 1, 288>}, {transform_indices = @transform_8, window_bounds = array<i64: 1, 8, 288>}]} {
    %cst = arith.constant 0.000000e+00 : f32
    %0 = vector.broadcast %cst : f32 to vector<8x19xf32>
    %c0 = arith.constant 0 : index
    %c0_0 = arith.constant 0 : index
    %1 = vector.load %arg10[%c0, %c0_0] : memref<8x384xf32, #tpu.memory_space<vmem>>, vector<8x19xf32>
    tpu.vector_store %arg10[%c0, %c0_0], %0 {strides = array<i32>} : memref<8x384xf32, #tpu.memory_space<vmem>>, vector<8x19xf32>,
    %cst_1 = arith.constant 0.000000e+00 : f32
    %2 = vector.broadcast %cst_1 : f32 to vector<8x77xf32>
    %c0_2 = arith.constant 0 : index
    %c307 = arith.constant 307 : index
    %3 = vector.load %arg10[%c0_2, %c307] : memref<8x384xf32, #tpu.memory_space<vmem>>, vector<8x77xf32>
    tpu.vector_store %arg10[%c0_2, %c307], %2 {strides = array<i32>} : memref<8x384xf32, #tpu.memory_space<vmem>>, vector<8x77xf32>,
    %c0_3 = arith.constant 0 : index
    %c0_4 = arith.constant 0 : index
    %4 = vector.load %arg8[%c0_3, %c0_4] : memref<1x288xf32, #tpu.memory_space<vmem>>, vector<1x288xf32>
    %c0_5 = arith.constant 0 : index
    %c0_6 = arith.constant 0 : index
    %c0_7 = arith.constant 0 : index
    %5 = vector.load %arg1[%c0_5, %c0_6, %c0_7] : memref<1x16x384xbf16, #tpu.memory_space<vmem>>, vector<1x16x288xbf16>
    %6 = vector.shape_cast %5 : vector<1x16x288xbf16> to vector<16x288xbf16>
    %c0_8 = arith.constant 0 : index
    %c0_9 = arith.constant 0 : index
    %c1 = arith.constant 1 : index
    %7 = vector.load %arg1[%c0_8, %c0_9, %c1] : memref<1x16x384xbf16, #tpu.memory_space<vmem>>, vector<1x16x288xbf16>
    %8 = vector.shape_cast %7 : vector<1x16x288xbf16> to vector<16x288xbf16>
    %c0_10 = arith.constant 0 : index
    %c0_11 = arith.constant 0 : index
    %c2 = arith.constant 2 : index
    %9 = vector.load %arg1[%c0_10, %c0_11, %c2] : memref<1x16x384xbf16, #tpu.memory_space<vmem>>, vector<1x16x288xbf16>
    %10 = vector.shape_cast %9 : vector<1x16x288xbf16> to vector<16x288xbf16>
    %c0_12 = arith.constant 0 : index
    %c0_13 = arith.constant 0 : index
    %c18 = arith.constant 18 : index
    %11 = vector.load %arg1[%c0_12, %c0_13, %c18] : memref<1x16x384xbf16, #tpu.memory_space<vmem>>, vector<1x16x288xbf16>
    %12 = vector.shape_cast %11 : vector<1x16x288xbf16> to vector<16x288xbf16>
    %c0_14 = arith.constant 0 : index
    %c0_15 = arith.constant 0 : index
    %c19 = arith.constant 19 : index
    %13 = vector.load %arg1[%c0_14, %c0_15, %c19] : memref<1x16x384xbf16, #tpu.memory_space<vmem>>, vector<1x16x288xbf16>
    %14 = vector.shape_cast %13 : vector<1x16x288xbf16> to vector<16x288xbf16>
    %c0_16 = arith.constant 0 : index
    %c0_17 = arith.constant 0 : index
    %c20 = arith.constant 20 : index
    %15 = vector.load %arg1[%c0_16, %c0_17, %c20] : memref<1x16x384xbf16, #tpu.memory_space<vmem>>, vector<1x16x288xbf16>
    %16 = vector.shape_cast %15 : vector<1x16x288xbf16> to vector<16x288xbf16>
    %c0_18 = arith.constant 0 : index
    %c0_19 = arith.constant 0 : index
    %c36 = arith.constant 36 : index
    %17 = vector.load %arg1[%c0_18, %c0_19, %c36] : memref<1x16x384xbf16, #tpu.memory_space<vmem>>, vector<1x16x288xbf16>
    %18 = vector.shape_cast %17 : vector<1x16x288xbf16> to vector<16x288xbf16>
    %c0_20 = arith.constant 0 : index
    %c0_21 = arith.constant 0 : index
    %c37 = arith.constant 37 : index
    %19 = vector.load %arg1[%c0_20, %c0_21, %c37] : memref<1x16x384xbf16, #tpu.memory_space<vmem>>, vector<1x16x288xbf16>
    %20 = vector.shape_cast %19 : vector<1x16x288xbf16> to vector<16x288xbf16>
    %c0_22 = arith.constant 0 : index
    %c0_23 = arith.constant 0 : index
    %c38 = arith.constant 38 : index
    %21 = vector.load %arg1[%c0_22, %c0_23, %c38] : memref<1x16x384xbf16, #tpu.memory_space<vmem>>, vector<1x16x288xbf16>
    %22 = vector.shape_cast %21 : vector<1x16x288xbf16> to vector<16x288xbf16>
    %23 = tpu.concatenate %6, %8, %10, %12, %14, %16, %18, %20, %22 in 0 : vector<16x288xbf16>, vector<16x288xbf16>, vector<16x288xbf16>, vector<16x288xbf16>, vector<16x288xbf16>, vector<16x288xbf16>, vector<16x288xbf16>, vector<16x288xbf16>, vector<16x288xbf16> -> vector<144x288xbf16>
    %c0_24 = arith.constant 0 : index
    %c0_25 = arith.constant 0 : index
    %24 = vector.load %arg2[%c0_24, %c0_25] : memref<16x144xbf16, #tpu.memory_space<vmem>>, vector<16x144xbf16>
    %cst_26 = arith.constant dense<0.000000e+00> : vector<16x288xf32>
    %25 = tpu.matmul %24, %23, %cst_26 {dimension_numbers = #tpu.dot_dimension_numbers<[1], [0], [0], [1], [0, 0, 1, 1], [], []>} : vector<16x144xbf16>, vector<144x288xbf16>, vector<16x288xf32> -> vector<16x288xf32>
    %c0_27 = arith.constant 0 : index
    %c0_28 = arith.constant 0 : index
    %26 = vector.load %arg3[%c0_27, %c0_28] : memref<16x1xf32, #tpu.memory_space<vmem>>, vector<16x1xf32>
    %27 = vector.broadcast %26 : vector<16x1xf32> to vector<16x288xf32>
    %28 = arith.addf %25, %27 : vector<16x288xf32>
    %29 = vector.extract_strided_slice %28 {offsets = [8, 0], sizes = [8, 288], strides = [1, 1]} : vector<16x288xf32> to vector<8x288xf32>
    %30 = vector.extract_strided_slice %28 {offsets = [0, 0], sizes = [8, 288], strides = [1, 1]} : vector<16x288xf32> to vector<8x288xf32>
    %cst_29 = arith.constant 0.000000e+00 : f32
    %31 = vector.broadcast %cst_29 : f32 to vector<8x288xf32>
    %32 = arith.maximumf %30, %31 : vector<8x288xf32>
    %33 = vector.broadcast %4 : vector<1x288xf32> to vector<8x288xf32>
    %34 = arith.mulf %32, %33 : vector<8x288xf32>
    %c0_30 = arith.constant 0 : index
    %c19_31 = arith.constant 19 : index
    %35 = vector.load %arg10[%c0_30, %c19_31] : memref<8x384xf32, #tpu.memory_space<vmem>>, vector<8x288xf32>
    tpu.vector_store %arg10[%c0_30, %c19_31], %34 {strides = array<i32>} : memref<8x384xf32, #tpu.memory_space<vmem>>, vector<8x288xf32>,
    %c0_32 = arith.constant 0 : index
    %c0_33 = arith.constant 0 : index
    %36 = vector.load %arg10[%c0_32, %c0_33] : memref<8x384xf32, #tpu.memory_space<vmem>>, vector<8x288xf32>
    %c0_34 = arith.constant 0 : index
    %c1_35 = arith.constant 1 : index
    %37 = vector.load %arg10[%c0_34, %c1_35] : memref<8x384xf32, #tpu.memory_space<vmem>>, vector<8x288xf32>
    %c0_36 = arith.constant 0 : index
    %c2_37 = arith.constant 2 : index
    %38 = vector.load %arg10[%c0_36, %c2_37] : memref<8x384xf32, #tpu.memory_space<vmem>>, vector<8x288xf32>
    %c0_38 = arith.constant 0 : index
    %c18_39 = arith.constant 18 : index
    %39 = vector.load %arg10[%c0_38, %c18_39] : memref<8x384xf32, #tpu.memory_space<vmem>>, vector<8x288xf32>
    %c0_40 = arith.constant 0 : index
    %c19_41 = arith.constant 19 : index
    %40 = vector.load %arg10[%c0_40, %c19_41] : memref<8x384xf32, #tpu.memory_space<vmem>>, vector<8x288xf32>
    %c0_42 = arith.constant 0 : index
    %c20_43 = arith.constant 20 : index
    %41 = vector.load %arg10[%c0_42, %c20_43] : memref<8x384xf32, #tpu.memory_space<vmem>>, vector<8x288xf32>
    %c0_44 = arith.constant 0 : index
    %c36_45 = arith.constant 36 : index
    %42 = vector.load %arg10[%c0_44, %c36_45] : memref<8x384xf32, #tpu.memory_space<vmem>>, vector<8x288xf32>
    %c0_46 = arith.constant 0 : index
    %c37_47 = arith.constant 37 : index
    %43 = vector.load %arg10[%c0_46, %c37_47] : memref<8x384xf32, #tpu.memory_space<vmem>>, vector<8x288xf32>
    %c0_48 = arith.constant 0 : index
    %c38_49 = arith.constant 38 : index
    %44 = vector.load %arg10[%c0_48, %c38_49] : memref<8x384xf32, #tpu.memory_space<vmem>>, vector<8x288xf32>
    %45 = tpu.concatenate %36, %37, %38, %39, %40, %41, %42, %43, %44 in 0 : vector<8x288xf32>, vector<8x288xf32>, vector<8x288xf32>, vector<8x288xf32>, vector<8x288xf32>, vector<8x288xf32>, vector<8x288xf32>, vector<8x288xf32>, vector<8x288xf32> -> vector<72x288xf32>
    %46 = arith.truncf %45 : vector<72x288xf32> to vector<72x288xbf16>
    %c0_50 = arith.constant 0 : index
    %c0_51 = arith.constant 0 : index
    %47 = vector.load %arg4[%c0_50, %c0_51] : memref<8x72xbf16, #tpu.memory_space<vmem>>, vector<8x72xbf16>
    %cst_52 = arith.constant dense<0.000000e+00> : vector<8x288xf32>
    %48 = tpu.matmul %47, %46, %cst_52 {dimension_numbers = #tpu.dot_dimension_numbers<[1], [0], [0], [1], [0, 0, 1, 1], [], []>} : vector<8x72xbf16>, vector<72x288xbf16>, vector<8x288xf32> -> vector<8x288xf32>
    %c0_53 = arith.constant 0 : index
    %c0_54 = arith.constant 0 : index
    %49 = vector.load %arg5[%c0_53, %c0_54] : memref<8x1xf32, #tpu.memory_space<vmem>>, vector<8x1xf32>
    %50 = vector.broadcast %49 : vector<8x1xf32> to vector<8x288xf32>
    %51 = arith.addf %48, %50 : vector<8x288xf32>
    %cst_55 = arith.constant 0.000000e+00 : f32
    %52 = vector.broadcast %cst_55 : f32 to vector<8x288xf32>
    %53 = arith.maximumf %51, %52 : vector<8x288xf32>
    %54 = vector.broadcast %4 : vector<1x288xf32> to vector<8x288xf32>
    %55 = arith.mulf %53, %54 : vector<8x288xf32>
    %c0_56 = arith.constant 0 : index
    %c19_57 = arith.constant 19 : index
    %56 = vector.load %arg10[%c0_56, %c19_57] : memref<8x384xf32, #tpu.memory_space<vmem>>, vector<8x288xf32>
    tpu.vector_store %arg10[%c0_56, %c19_57], %55 {strides = array<i32>} : memref<8x384xf32, #tpu.memory_space<vmem>>, vector<8x288xf32>,
    %c0_58 = arith.constant 0 : index
    %c0_59 = arith.constant 0 : index
    %57 = vector.load %arg10[%c0_58, %c0_59] : memref<8x384xf32, #tpu.memory_space<vmem>>, vector<8x288xf32>
    %c0_60 = arith.constant 0 : index
    %c1_61 = arith.constant 1 : index
    %58 = vector.load %arg10[%c0_60, %c1_61] : memref<8x384xf32, #tpu.memory_space<vmem>>, vector<8x288xf32>
    %c0_62 = arith.constant 0 : index
    %c2_63 = arith.constant 2 : index
    %59 = vector.load %arg10[%c0_62, %c2_63] : memref<8x384xf32, #tpu.memory_space<vmem>>, vector<8x288xf32>
    %c0_64 = arith.constant 0 : index
    %c18_65 = arith.constant 18 : index
    %60 = vector.load %arg10[%c0_64, %c18_65] : memref<8x384xf32, #tpu.memory_space<vmem>>, vector<8x288xf32>
    %c0_66 = arith.constant 0 : index
    %c19_67 = arith.constant 19 : index
    %61 = vector.load %arg10[%c0_66, %c19_67] : memref<8x384xf32, #tpu.memory_space<vmem>>, vector<8x288xf32>
    %c0_68 = arith.constant 0 : index
    %c20_69 = arith.constant 20 : index
    %62 = vector.load %arg10[%c0_68, %c20_69] : memref<8x384xf32, #tpu.memory_space<vmem>>, vector<8x288xf32>
    %c0_70 = arith.constant 0 : index
    %c36_71 = arith.constant 36 : index
    %63 = vector.load %arg10[%c0_70, %c36_71] : memref<8x384xf32, #tpu.memory_space<vmem>>, vector<8x288xf32>
    %c0_72 = arith.constant 0 : index
    %c37_73 = arith.constant 37 : index
    %64 = vector.load %arg10[%c0_72, %c37_73] : memref<8x384xf32, #tpu.memory_space<vmem>>, vector<8x288xf32>
    %c0_74 = arith.constant 0 : index
    %c38_75 = arith.constant 38 : index
    %65 = vector.load %arg10[%c0_74, %c38_75] : memref<8x384xf32, #tpu.memory_space<vmem>>, vector<8x288xf32>
    %66 = tpu.concatenate %57, %58, %59, %60, %61, %62, %63, %64, %65 in 0 : vector<8x288xf32>, vector<8x288xf32>, vector<8x288xf32>, vector<8x288xf32>, vector<8x288xf32>, vector<8x288xf32>, vector<8x288xf32>, vector<8x288xf32>, vector<8x288xf32> -> vector<72x288xf32>
    %67 = arith.truncf %66 : vector<72x288xf32> to vector<72x288xbf16>
    %c0_76 = arith.constant 0 : index
    %c0_77 = arith.constant 0 : index
    %68 = vector.load %arg6[%c0_76, %c0_77] : memref<8x72xbf16, #tpu.memory_space<vmem>>, vector<8x72xbf16>
    %cst_78 = arith.constant dense<0.000000e+00> : vector<8x288xf32>
    %69 = tpu.matmul %68, %67, %cst_78 {dimension_numbers = #tpu.dot_dimension_numbers<[1], [0], [0], [1], [0, 0, 1, 1], [], []>} : vector<8x72xbf16>, vector<72x288xbf16>, vector<8x288xf32> -> vector<8x288xf32>
    %c0_79 = arith.constant 0 : index
    %c0_80 = arith.constant 0 : index
    %70 = vector.load %arg7[%c0_79, %c0_80] : memref<8x1xf32, #tpu.memory_space<vmem>>, vector<8x1xf32>
    %71 = vector.broadcast %70 : vector<8x1xf32> to vector<8x288xf32>
    %72 = arith.addf %69, %71 : vector<8x288xf32>
    %73 = arith.addf %72, %29 : vector<8x288xf32>
    %cst_81 = arith.constant 0.000000e+00 : f32
    %74 = vector.broadcast %cst_81 : f32 to vector<8x288xf32>
    %75 = arith.maximumf %73, %74 : vector<8x288xf32>
    %c0_82 = arith.constant 0 : index
    %c0_83 = arith.constant 0 : index
    %c0_84 = arith.constant 0 : index
    %76 = vector.load %arg9[%c0_82, %c0_83, %c0_84] : memref<1x8x288xf32, #tpu.memory_space<vmem>>, vector<1x8x288xf32>
    %77 = vector.shape_cast %76 : vector<1x8x288xf32> to vector<8x288xf32>
    %78 = vector.shape_cast %75 : vector<8x288xf32> to vector<1x8x288xf32>
    tpu.vector_store %arg9[%c0_82, %c0_83, %c0_84], %78 {strides = array<i32>} : memref<1x8x288xf32, #tpu.memory_space<vmem>>, vector<1x8x288xf32>,
    return
  }
  func.func @transform_0(%arg0: i32) -> (i32, i32, i32) {
    %c0_i32 = arith.constant 0 : i32
    %c0_i32_0 = arith.constant 0 : i32
    %c0_i32_1 = arith.constant 0 : i32
    return %arg0, %c0_i32, %c0_i32_0 : i32, i32, i32
  }
  func.func @transform_1(%arg0: i32) -> (i32, i32) {
    %c0_i32 = arith.constant 0 : i32
    %c0_i32_0 = arith.constant 0 : i32
    %c0_i32_1 = arith.constant 0 : i32
    return %c0_i32, %c0_i32_0 : i32, i32
  }
  func.func @transform_2(%arg0: i32) -> (i32, i32) {
    %c0_i32 = arith.constant 0 : i32
    %c0_i32_0 = arith.constant 0 : i32
    %c0_i32_1 = arith.constant 0 : i32
    return %c0_i32, %c0_i32_0 : i32, i32
  }
  func.func @transform_3(%arg0: i32) -> (i32, i32) {
    %c0_i32 = arith.constant 0 : i32
    %c0_i32_0 = arith.constant 0 : i32
    %c0_i32_1 = arith.constant 0 : i32
    return %c0_i32, %c0_i32_0 : i32, i32
  }
  func.func @transform_4(%arg0: i32) -> (i32, i32) {
    %c0_i32 = arith.constant 0 : i32
    %c0_i32_0 = arith.constant 0 : i32
    %c0_i32_1 = arith.constant 0 : i32
    return %c0_i32, %c0_i32_0 : i32, i32
  }
  func.func @transform_5(%arg0: i32) -> (i32, i32) {
    %c0_i32 = arith.constant 0 : i32
    %c0_i32_0 = arith.constant 0 : i32
    %c0_i32_1 = arith.constant 0 : i32
    return %c0_i32, %c0_i32_0 : i32, i32
  }
  func.func @transform_6(%arg0: i32) -> (i32, i32) {
    %c0_i32 = arith.constant 0 : i32
    %c0_i32_0 = arith.constant 0 : i32
    %c0_i32_1 = arith.constant 0 : i32
    return %c0_i32, %c0_i32_0 : i32, i32
  }
  func.func @transform_7(%arg0: i32) -> (i32, i32) {
    %c0_i32 = arith.constant 0 : i32
    %c0_i32_0 = arith.constant 0 : i32
    %c0_i32_1 = arith.constant 0 : i32
    return %c0_i32, %c0_i32_0 : i32, i32
  }
  func.func @transform_8(%arg0: i32) -> (i32, i32, i32) {
    %c0_i32 = arith.constant 0 : i32
    %c0_i32_0 = arith.constant 0 : i32
    %c0_i32_1 = arith.constant 0 : i32
    return %arg0, %c0_i32, %c0_i32_0 : i32, i32, i32
  }
}

</mosaic_0001>

<llo_original>
// kernel: up_forward.1
$region0: #{up_forward.1}
  #allocation0 [shape = 'u32[]', space=smem, size = 0x4, offset = 0x4, fixed_abs, tag = 'smem constant byte address 0x4 - core index']
  #allocation1 [shape = 'u32[144,128]{1,0:T(1,128)}', space=vmem, size = 0x12000, scoped, tag = 'internal scratch']
  #allocation2 [shape = 'f32[8,384]{1,0:T(8,128)}', space=vmem, size = 0x3000, scoped, tag = 'scratch operand']
  %s0 = inlined_call_operand.vmem [shape: bf16[2,16,384], index: 0, kind: input, shape index: {}]
  %s1 = inlined_call_operand.vmem [shape: bf16[16,144], index: 1, kind: input, shape index: {}]
  %s2 = inlined_call_operand.vmem [shape: f32[16,1], index: 2, kind: input, shape index: {}]
  %s3 = inlined_call_operand.vmem [shape: bf16[8,72], index: 3, kind: input, shape index: {}]
  %s4 = inlined_call_operand.vmem [shape: f32[8,1], index: 4, kind: input, shape index: {}]
  %s5 = inlined_call_operand.vmem [shape: bf16[8,72], index: 5, kind: input, shape index: {}]
  %s6 = inlined_call_operand.vmem [shape: f32[8,1], index: 6, kind: input, shape index: {}]
  %s7 = inlined_call_operand.vmem [shape: f32[1,288], index: 7, kind: input, shape index: {}]
  %s8 = inlined_call_operand.vmem [shape: f32[2,8,288], index: 8, kind: output, shape index: {}]
  %s9 = sld [smem:[#allocation0]]
  $region65: #{up_forward.1} parent=0
    _
  %s11 = ssub.s32 1, %s9
  %s12 = scalar_select 0, %s11, %s9
  loop: start=0, step=1, limit=4
  $region2: #{up_forward.1} parent=0 // loop_pre_header
    _
  $region3: #{up_forward.1} parent=0 // loop_header
    %s14 = sphi 0, %s18
    %p15 = scmp.ge.s32.totalorder %s14, 4
    %s24 = sphi 0, %s26
    %s27 = sphi 0, %s24
    %s28 = sphi 0, %s27
    %s44 = sphi 0, %s28
    %s48 = sphi 0, %s48
    %s50 = sphi 0, %s48
    %s51 = sphi 0, %s50
    %s65 = sphi 0, %s51
    %s69 = sphi 0, %s69
    %s71 = sphi 0, %s69
    %s72 = sphi 0, %s71
    %s86 = sphi 0, %s72
    %s90 = sphi 0, %s90
    %s92 = sphi 0, %s90
    %s93 = sphi 0, %s92
    %s107 = sphi 0, %s93
    %s111 = sphi 0, %s111
    %s113 = sphi 0, %s111
    %s114 = sphi 0, %s113
    %s128 = sphi 0, %s114
    %s132 = sphi 0, %s132
    %s134 = sphi 0, %s132
    %s135 = sphi 0, %s134
    %s149 = sphi 0, %s135
    %s153 = sphi 0, %s153
    %s155 = sphi 0, %s153
    %s156 = sphi 0, %s155
    %s170 = sphi 0, %s156
    %s174 = sphi 0, %s174
    %s176 = sphi 0, %s174
    %s177 = sphi 0, %s176
    %s191 = sphi 0, %s177
    %s197 = sphi 0, %s199
    %s200 = sphi 0, %s197
    %s201 = sphi 0, %s200
    %s217 = sphi 0, %s201
  $region4: #{up_forward.1} parent=0 // loop_header_branch
    %17 = sbr.rel (%p15) target = $region8
  $region5: #{up_forward.1} parent=0 // loop_body
    %s19 = ssub.s32 %s14, 1
    %s20 = ssub.s32 %s14, 2
    %s21 = sadd.s32 %s14, 1
    %s22 = ssub.s32 %s14, %s21
    %p23 = scmp.eq.s32.totalorder %s22, 0
    %s25 = sadd.s32 %s24, 1
    %s26 = scalar_select %p23, %s24, %s25
    %p29 = pneg %p23
    %p30 = scmp.eq.s32.totalorder %s14, 1
    %p31 = por %p29, %p30
    %p32 = scmp.ne.s32.totalorder %s24, %s27
    %p33 = scmp.eq.s32.totalorder %s14, 0
    %p34 = por %p32, %p33
    %p35 = scmp.ne.s32.totalorder %s24, %s27
    %p36 = scmp.eq.s32.totalorder %s19, 1
    %p37 = por %p35, %p36
    %p38 = scmp.ne.s32.totalorder %s27, %s28
    %p39 = scmp.eq.s32.totalorder %s19, 0
    %p40 = por %p38, %p39
    %p41 = scmp.ne.s32.totalorder %s27, %s28
    %p42 = scmp.eq.s32.totalorder %s20, 1
    %p43 = por %p41, %p42
    %p45 = scmp.ne.s32.totalorder %s28, %s44
    %p46 = scmp.eq.s32.totalorder %s20, 0
    %p47 = por %p45, %p46
    %s49 = sadd.s32 %s48, 1
    %p52 = scmp.eq.s32.totalorder %s14, 1
    %p53 = scmp.ne.s32.totalorder %s48, %s50
    %p54 = scmp.eq.s32.totalorder %s14, 0
    %p55 = por %p53, %p54
    %p56 = scmp.ne.s32.totalorder %s48, %s50
    %p57 = scmp.eq.s32.totalorder %s19, 1
    %p58 = por %p56, %p57
    %p59 = scmp.ne.s32.totalorder %s50, %s51
    %p60 = scmp.eq.s32.totalorder %s19, 0
    %p61 = por %p59, %p60
    %p62 = scmp.ne.s32.totalorder %s50, %s51
    %p63 = scmp.eq.s32.totalorder %s20, 1
    %p64 = por %p62, %p63
    %p66 = scmp.ne.s32.totalorder %s51, %s65
    %p67 = scmp.eq.s32.totalorder %s20, 0
    %p68 = por %p66, %p67
    %s70 = sadd.s32 %s69, 1
    %p73 = scmp.eq.s32.totalorder %s14, 1
    %p74 = scmp.ne.s32.totalorder %s69, %s71
    %p75 = scmp.eq.s32.totalorder %s14, 0
    %p76 = por %p74, %p75
    %p77 = scmp.ne.s32.totalorder %s69, %s71
    %p78 = scmp.eq.s32.totalorder %s19, 1
    %p79 = por %p77, %p78
    %p80 = scmp.ne.s32.totalorder %s71, %s72
    %p81 = scmp.eq.s32.totalorder %s19, 0
    %p82 = por %p80, %p81
    %p83 = scmp.ne.s32.totalorder %s71, %s72
    %p84 = scmp.eq.s32.totalorder %s20, 1
    %p85 = por %p83, %p84
    %p87 = scmp.ne.s32.totalorder %s72, %s86
    %p88 = scmp.eq.s32.totalorder %s20, 0
    %p89 = por %p87, %p88
    %s91 = sadd.s32 %s90, 1
    %p94 = scmp.eq.s32.totalorder %s14, 1
    %p95 = scmp.ne.s32.totalorder %s90, %s92
    %p96 = scmp.eq.s32.totalorder %s14, 0
    %p97 = por %p95, %p96
    %p98 = scmp.ne.s32.totalorder %s90, %s92
    %p99 = scmp.eq.s32.totalorder %s19, 1
    %p100 = por %p98, %p99
    %p101 = scmp.ne.s32.totalorder %s92, %s93
    %p102 = scmp.eq.s32.totalorder %s19, 0
    %p103 = por %p101, %p102
    %p104 = scmp.ne.s32.totalorder %s92, %s93
    %p105 = scmp.eq.s32.totalorder %s20, 1
    %p106 = por %p104, %p105
    %p108 = scmp.ne.s32.totalorder %s93, %s107
    %p109 = scmp.eq.s32.totalorder %s20, 0
    %p110 = por %p108, %p109
    %s112 = sadd.s32 %s111, 1
    %p115 = scmp.eq.s32.totalorder %s14, 1
    %p116 = scmp.ne.s32.totalorder %s111, %s113
    %p117 = scmp.eq.s32.totalorder %s14, 0
    %p118 = por %p116, %p117
    %p119 = scmp.ne.s32.totalorder %s111, %s113
    %p120 = scmp.eq.s32.totalorder %s19, 1
    %p121 = por %p119, %p120
    %p122 = scmp.ne.s32.totalorder %s113, %s114
    %p123 = scmp.eq.s32.totalorder %s19, 0
    %p124 = por %p122, %p123
    %p125 = scmp.ne.s32.totalorder %s113, %s114
    %p126 = scmp.eq.s32.totalorder %s20, 1
    %p127 = por %p125, %p126
    %p129 = scmp.ne.s32.totalorder %s114, %s128
    %p130 = scmp.eq.s32.totalorder %s20, 0
    %p131 = por %p129, %p130
    %s133 = sadd.s32 %s132, 1
    %p136 = scmp.eq.s32.totalorder %s14, 1
    %p137 = scmp.ne.s32.totalorder %s132, %s134
    %p138 = scmp.eq.s32.totalorder %s14, 0
    %p139 = por %p137, %p138
    %p140 = scmp.ne.s32.totalorder %s132, %s134
    %p141 = scmp.eq.s32.totalorder %s19, 1
    %p142 = por %p140, %p141
    %p143 = scmp.ne.s32.totalorder %s134, %s135
    %p144 = scmp.eq.s32.totalorder %s19, 0
    %p145 = por %p143, %p144
    %p146 = scmp.ne.s32.totalorder %s134, %s135
    %p147 = scmp.eq.s32.totalorder %s20, 1
    %p148 = por %p146, %p147
    %p150 = scmp.ne.s32.totalorder %s135, %s149
    %p151 = scmp.eq.s32.totalorder %s20, 0
    %p152 = por %p150, %p151
    %s154 = sadd.s32 %s153, 1
    %p157 = scmp.eq.s32.totalorder %s14, 1
    %p158 = scmp.ne.s32.totalorder %s153, %s155
    %p159 = scmp.eq.s32.totalorder %s14, 0
    %p160 = por %p158, %p159
    %p161 = scmp.ne.s32.totalorder %s153, %s155
    %p162 = scmp.eq.s32.totalorder %s19, 1
    %p163 = por %p161, %p162
    %p164 = scmp.ne.s32.totalorder %s155, %s156
    %p165 = scmp.eq.s32.totalorder %s19, 0
    %p166 = por %p164, %p165
    %p167 = scmp.ne.s32.totalorder %s155, %s156
    %p168 = scmp.eq.s32.totalorder %s20, 1
    %p169 = por %p167, %p168
    %p171 = scmp.ne.s32.totalorder %s156, %s170
    %p172 = scmp.eq.s32.totalorder %s20, 0
    %p173 = por %p171, %p172
    %s175 = sadd.s32 %s174, 1
    %p178 = scmp.eq.s32.totalorder %s14, 1
    %p179 = scmp.ne.s32.totalorder %s174, %s176
    %p180 = scmp.eq.s32.totalorder %s14, 0
    %p181 = por %p179, %p180
    %p182 = scmp.ne.s32.totalorder %s174, %s176
    %p183 = scmp.eq.s32.totalorder %s19, 1
    %p184 = por %p182, %p183
    %p185 = scmp.ne.s32.totalorder %s176, %s177
    %p186 = scmp.eq.s32.totalorder %s19, 0
    %p187 = por %p185, %p186
    %p188 = scmp.ne.s32.totalorder %s176, %s177
    %p189 = scmp.eq.s32.totalorder %s20, 1
    %p190 = por %p188, %p189
    %p192 = scmp.ne.s32.totalorder %s177, %s191
    %p193 = scmp.eq.s32.totalorder %s20, 0
    %p194 = por %p192, %p193
    %s195 = ssub.s32 %s14, %s21
    %p196 = scmp.eq.s32.totalorder %s195, 0
    %s198 = sadd.s32 %s197, 1
    %s199 = scalar_select %p196, %s197, %s198
    %p202 = pneg %p196
    %p203 = scmp.eq.s32.totalorder %s14, 1
    %p204 = por %p202, %p203
    %p205 = scmp.ne.s32.totalorder %s197, %s200
    %p206 = scmp.eq.s32.totalorder %s14, 0
    %p207 = por %p205, %p206
    %p208 = scmp.ne.s32.totalorder %s197, %s200
    %p209 = scmp.eq.s32.totalorder %s19, 1
    %p210 = por %p208, %p209
    %p211 = scmp.ne.s32.totalorder %s200, %s201
    %p212 = scmp.eq.s32.totalorder %s19, 0
    %p213 = por %p211, %p212
    %p214 = scmp.ne.s32.totalorder %s200, %s201
    %p215 = scmp.eq.s32.totalorder %s20, 1
    %p216 = por %p214, %p215
    %p218 = scmp.ne.s32.totalorder %s201, %s217
    %p219 = scmp.eq.s32.totalorder %s20, 0
    %p220 = por %p218, %p219
    %p221 = scmp.le.s32.totalorder 1, %s14
    %p222 = scmp.lt.s32.totalorder %s14, 3
    %p223 = pnand %p221, %p222
    %p224 = pneg %p223
    // Predicated region
    $region9: #{up_forward.1} parent=5 // pred_check
      _
    $region10: #{up_forward.1} parent=5 // pred_check_branch
      %226 = sbr.rel (%p223) target = $region12
    $region11: #{up_forward.1} parent=5 // pred_region
      %s227 = ssub.s32 %s14, 1
      // Predicated region
      $region13: #{up_forward.1} parent=11 // pred_check
        %p228 = pneg %p61
      $region14: #{up_forward.1} parent=11 // pred_check_branch
        %230 = sbr.rel (%p228) target = $region16
      $region15: #{up_forward.1} parent=11 // pred_region
        _
      $region16: #{up_forward.1} parent=11 // pred_fallthru
        _
      // Predicated region
      $region17: #{up_forward.1} parent=11 // pred_check
        %p231 = pneg %p82
      $region18: #{up_forward.1} parent=11 // pred_check_branch
        %233 = sbr.rel (%p231) target = $region20
      $region19: #{up_forward.1} parent=11 // pred_region
        _
      $region20: #{up_forward.1} parent=11 // pred_fallthru
        _
      // Predicated region
      $region21: #{up_forward.1} parent=11 // pred_check
        %p234 = pneg %p103
      $region22: #{up_forward.1} parent=11 // pred_check_branch
        %236 = sbr.rel (%p234) target = $region24
      $region23: #{up_forward.1} parent=11 // pred_region
        _
      $region24: #{up_forward.1} parent=11 // pred_fallthru
        _
      // Predicated region
      $region25: #{up_forward.1} parent=11 // pred_check
        %p237 = pneg %p124
      $region26: #{up_forward.1} parent=11 // pred_check_branch
        %239 = sbr.rel (%p237) target = $region28
      $region27: #{up_forward.1} parent=11 // pred_region
        _
      $region28: #{up_forward.1} parent=11 // pred_fallthru
        _
      // Predicated region
      $region29: #{up_forward.1} parent=11 // pred_check
        %p240 = pneg %p145
      $region30: #{up_forward.1} parent=11 // pred_check_branch
        %242 = sbr.rel (%p240) target = $region32
      $region31: #{up_forward.1} parent=11 // pred_region
        _
      $region32: #{up_forward.1} parent=11 // pred_fallthru
        _
      // Predicated region
      $region33: #{up_forward.1} parent=11 // pred_check
        %p243 = pneg %p166
      $region34: #{up_forward.1} parent=11 // pred_check_branch
        %245 = sbr.rel (%p243) target = $region36
      $region35: #{up_forward.1} parent=11 // pred_region
        _
      $region36: #{up_forward.1} parent=11 // pred_fallthru
        _
      // Predicated region
      $region37: #{up_forward.1} parent=11 // pred_check
        %p246 = pneg %p187
      $region38: #{up_forward.1} parent=11 // pred_check_branch
        %248 = sbr.rel (%p246) target = $region40
      $region39: #{up_forward.1} parent=11 // pred_region
        _
      $region40: #{up_forward.1} parent=11 // pred_fallthru
        _
    $region12: #{up_forward.1} parent=5 // pred_fallthru
      _
    %p249 = scmp.lt.s32.totalorder %s14, 2
    // Predicated region
    $region41: #{up_forward.1} parent=5 // pred_check
      %p250 = pneg %p249
    $region42: #{up_forward.1} parent=5 // pred_check_branch
      %252 = sbr.rel (%p250) target = $region44
    $region43: #{up_forward.1} parent=5 // pred_region
      // Predicated region
      $region45: #{up_forward.1} parent=43 // pred_check
        %p253 = pneg %p34
      $region46: #{up_forward.1} parent=43 // pred_check_branch
        %255 = sbr.rel (%p253) target = $region48
      $region47: #{up_forward.1} parent=43 // pred_region
        %p256 = scmp.lt.s32.totalorder %s14, 1
        %s257 = scalar_select %p256, %s14, 1
        %s258 = smul.addr %s257, 6
        %s259 = smul.addr %s258, 4
        %s260 = scalar_lea.vmem %s0, %s259
      $region48: #{up_forward.1} parent=43 // pred_fallthru
        _
    $region44: #{up_forward.1} parent=5 // pred_fallthru
      _
    %p261 = scmp.le.s32.totalorder 1, %s14
    %p262 = scmp.lt.s32.totalorder %s14, 3
    %p263 = pnand %p261, %p262
    %p264 = pneg %p263
    // Predicated region
    $region49: #{up_forward.1} parent=5 // pred_check
      _
    $region50: #{up_forward.1} parent=5 // pred_check_branch
      %266 = sbr.rel (%p263) target = $region52
    $region51: #{up_forward.1} parent=5 // pred_region
      %s267 = ssub.s32 %s14, 1
      %p268 = scmp.lt.s32.totalorder %s19, 1
      %s269 = scalar_select %p268, %s19, 1
      %s270 = smul.addr %s269, 6
      %s271 = smul.addr %s270, 4
      %s272 = scalar_lea.vmem %s0, %s271
      %p273 = pneg %p40
      %p274 = pneg %p37
      %p275 = pneg %p61
      %p276 = pneg %p58
      %p277 = pneg %p82
      %p278 = pneg %p79
      %p279 = pneg %p103
      %p280 = pneg %p100
      %p281 = pneg %p124
      %p282 = pneg %p121
      %p283 = pneg %p145
      %p284 = pneg %p142
      %p285 = pneg %p166
      %p286 = pneg %p163
      %p287 = pneg %p187
      %p288 = pneg %p184
      %p289 = pneg %p213
      %p290 = pneg %p210
      %p291 = scmp.lt.s32.totalorder %s19, 1
      %s292 = scalar_select %p291, %s19, 1
      %s293 = smul.addr %s292, 3
      %s294 = smul.addr %s293, 8
      %s295 = scalar_lea.vmem %s8, %s294
      %p296 = scmp.lt.s32.totalorder %s19, 1
      %s297 = scalar_select %p296, %s19, 1
      %s298 = smul.addr %s297, 6
      %s299 = smul.addr %s298, 4
      %s300 = scalar_lea.vmem %s0, %s299
      %p301 = scmp.lt.s32.totalorder %s19, 1
      %s302 = scalar_select %p301, %s19, 1
      %s303 = smul.addr %s302, 3
      %s304 = smul.addr %s303, 8
      %s305 = scalar_lea.vmem %s8, %s304
      %vm307 = vcmask 154624
      %308 = vst.msk [vmem:[#allocation2] sm:$0xff] %vm307, 0.0
      %vm309 = vcmask 1047960
      %310 = vst.msk [vmem:[#allocation2 + $0x10] sm:$0xff] %vm309, 0.0
      %v311 = vld [vmem:[%s7] sm:$0x7]
      %v312 = vld [vmem:[%s300] sm:$0xff]
      %v313 = vld [vmem:[%s300 + $0x8] sm:$0xf]
      %v314 = vld [vmem:[%s300 + $0xc] sm:$0xff]
      %v315 = vld [vmem:[%s300 + $0x14] sm:$0xf]
      %v320 = vunpack.c.l.b16 %v312
      %v321 = vunpack.c.h.b16 %v312
      %v322 = vunpack.c.l.b16 %v313
      %v323 = vunpack.c.l.b16 %v314
      %v324 = vunpack.c.h.b16 %v314
      %v325 = vunpack.c.l.b16 %v315
      %v326 = vpack.c.b16 %v323, %v320
      %v327 = vpack.c.b16 %v324, %v321
      %v328 = vpack.c.b16 %v325, %v322
      %332 = vrot.lane.b32.xlu0 %v326, 127
      %v333 = vpop.permute.xlu0 %332
      %334 = vrot.lane.b32.xlu0 %v327, 127
      %v335 = vpop.permute.xlu0 %334
      %336 = vrot.lane.b32.xlu0 %v328, 127
      %v337 = vpop.permute.xlu0 %336
      %vm338 = vcmask 1039360
      %v339 = vsel %vm338, %v333, %v335
      %v340 = vsel %vm338, %v335, %v337
      %344 = vrot.lane.b32.xlu0 %v326, 126
      %v345 = vpop.permute.xlu0 %344
      %346 = vrot.lane.b32.xlu0 %v327, 126
      %v347 = vpop.permute.xlu0 %346
      %348 = vrot.lane.b32.xlu0 %v328, 126
      %v349 = vpop.permute.xlu0 %348
      %vm350 = vcmask 1031168
      %v351 = vsel %vm350, %v345, %v347
      %v352 = vsel %vm350, %v347, %v349
      %356 = vrot.lane.b32.xlu0 %v326, 110
      %v357 = vpop.permute.xlu0 %356
      %358 = vrot.lane.b32.xlu0 %v327, 110
      %v359 = vpop.permute.xlu0 %358
      %360 = vrot.lane.b32.xlu0 %v328, 110
      %v361 = vpop.permute.xlu0 %360
      %vm362 = vcmask 900096
      %v363 = vsel %vm362, %v357, %v359
      %v364 = vsel %vm362, %v359, %v361
      %368 = vrot.lane.b32.xlu0 %v326, 109
      %v369 = vpop.permute.xlu0 %368
      %370 = vrot.lane.b32.xlu0 %v327, 109
      %v371 = vpop.permute.xlu0 %370
      %372 = vrot.lane.b32.xlu0 %v328, 109
      %v373 = vpop.permute.xlu0 %372
      %vm374 = vcmask 891904
      %v375 = vsel %vm374, %v369, %v371
      %v376 = vsel %vm374, %v371, %v373
      %380 = vrot.lane.b32.xlu0 %v326, 108
      %v381 = vpop.permute.xlu0 %380
      %382 = vrot.lane.b32.xlu0 %v327, 108
      %v383 = vpop.permute.xlu0 %382
      %384 = vrot.lane.b32.xlu0 %v328, 108
      %v385 = vpop.permute.xlu0 %384
      %vm386 = vcmask 883712
      %v387 = vsel %vm386, %v381, %v383
      %v388 = vsel %vm386, %v383, %v385
      %392 = vrot.lane.b32.xlu0 %v326, 92
      %v393 = vpop.permute.xlu0 %392
      %394 = vrot.lane.b32.xlu0 %v327, 92
      %v395 = vpop.permute.xlu0 %394
      %396 = vrot.lane.b32.xlu0 %v328, 92
      %v397 = vpop.permute.xlu0 %396
      %vm398 = vcmask 752640
      %v399 = vsel %vm398, %v393, %v395
      %v400 = vsel %vm398, %v395, %v397
      %404 = vrot.lane.b32.xlu0 %v326, 91
      %v405 = vpop.permute.xlu0 %404
      %406 = vrot.lane.b32.xlu0 %v327, 91
      %v407 = vpop.permute.xlu0 %406
      %408 = vrot.lane.b32.xlu0 %v328, 91
      %v409 = vpop.permute.xlu0 %408
      %vm410 = vcmask 744448
      %v411 = vsel %vm410, %v405, %v407
      %v412 = vsel %vm410, %v407, %v409
      %416 = vrot.lane.b32.xlu0 %v326, 90
      %v417 = vpop.permute.xlu0 %416
      %418 = vrot.lane.b32.xlu0 %v327, 90
      %v419 = vpop.permute.xlu0 %418
      %420 = vrot.lane.b32.xlu0 %v328, 90
      %v421 = vpop.permute.xlu0 %420
      %vm422 = vcmask 736256
      %v423 = vsel %vm422, %v417, %v419
      %v424 = vsel %vm422, %v419, %v421
      %v428 = vld [vmem:[%s1] sm:$0xff]
      %v429 = vld [vmem:[%s1 + $0x8] sm:$0xff]
      %v430 = vld [vmem:[%s2] sm:$0xff]
      %v431 = vld [vmem:[%s2 + $0x8] sm:$0xff]
      %433 = vset.pattern.permute.xlu0 0
      %434 = vperm.xlu0 %433, %v430
      %v435 = vpop.permute.xlu0 %434
      %438 = vset.pattern.permute.xlu0 0
      %439 = vperm.xlu0 %438, %v431
      %v440 = vpop.permute.xlu0 %439
      %v444 = vunpack.c.l.b16 %v428
      %v445 = vunpack.c.h.b16 %v428
      %v446 = vunpack.c.l.b16 %v429
      %v447 = vunpack.c.h.b16 %v429
      %v448 = vpack.c.b16 %v446, %v444
      %v449 = vpack.c.b16 %v447, %v445
      %vm451 = vcmask 130048
      %v453 = vsel %vm451, %v449, 0
      %455 = vmatprep.subr.bf16.mxu0 %v412
      %456 = vmatpush1.bf16.msra.mxu0 %v411
      %457 = vmatprep.subr.bf16.mxu0 %v400
      %458 = vmatpush1.bf16.msra.mxu0 %v399
      %459 = vmatprep.subr.bf16.mxu0 %v388
      %460 = vmatpush1.bf16.msra.mxu0 %v387
      %461 = vmatprep.subr.bf16.mxu0 %v376
      %462 = vmatpush1.bf16.msra.mxu0 %v375
      %463 = vmatprep.subr.bf16.mxu0 %v364
      %464 = vmatpush1.bf16.msra.mxu0 %v363
      %465 = vmatprep.subr.bf16.mxu0 %v352
      %466 = vmatpush1.bf16.msra.mxu0 %v351
      %467 = vmatprep.subr.bf16.mxu0 %v340
      %468 = vmatpush1.bf16.msra.mxu0 %v339
      %469 = vmatprep.subr.bf16.mxu0 %v327
      %470 = vmatpush1.bf16.msra.mxu0 %v326
      %471 = vmatprep.subr.bf16.mxu0 0
      %472 = vmatpush2.bf16.msra.mxu0 0
      %473 = vmatprep.subr.bf16.mxu0 0
      %474 = vmatpush2.bf16.msra.mxu0 0
      %475 = vmatprep.subr.bf16.mxu0 0
      %476 = vmatpush2.bf16.msra.mxu0 0
      %477 = vmatprep.subr.bf16.mxu0 0
      %478 = vmatpush2.bf16.msra.mxu0 0
      %479 = vmatprep.subr.bf16.mxu0 0
      %480 = vmatpush2.bf16.msra.mxu0 0
      %481 = vmatprep.subr.bf16.mxu0 0
      %482 = vmatpush2.bf16.msra.mxu0 0
      %483 = vmatprep.subr.bf16.mxu0 0
      %484 = vmatpush2.bf16.msra.mxu0 0
      %485 = vmatprep.subr.bf16.mxu0 %v424
      %486 = vmatpush2.bf16.msra.mxu0 %v423
      %487 = vmatprep.mubr.bf16.mxu0 %v453
      %488 = vmatmul.mubr.bf16.gmra.mxu0 %v448
      %v489 = vpop.f32.mrf.mxu0
      %v490 = vadd.f32 %v435, %v489
      %v491 = vpop.f32.mrf.mxu0
      %v492 = vadd.f32 %v435, %v491
      %v493 = vpop.f32.mrf.mxu0
      %v494 = vadd.f32 %v440, %v493
      %v495 = vpop.f32.mrf.mxu0
      %v496 = vadd.f32 %v440, %v495
      %497 = vdwg.mxu0
      %498 = vmatprep.subr.bf16.mxu0 0
      %499 = vmatpush1.bf16.msra.mxu0 %v409
      %500 = vmatprep.subr.bf16.mxu0 0
      %501 = vmatpush1.bf16.msra.mxu0 %v397
      %502 = vmatprep.subr.bf16.mxu0 0
      %503 = vmatpush1.bf16.msra.mxu0 %v385
      %504 = vmatprep.subr.bf16.mxu0 0
      %505 = vmatpush1.bf16.msra.mxu0 %v373
      %506 = vmatprep.subr.bf16.mxu0 0
      %507 = vmatpush1.bf16.msra.mxu0 %v361
      %508 = vmatprep.subr.bf16.mxu0 0
      %509 = vmatpush1.bf16.msra.mxu0 %v349
      %510 = vmatprep.subr.bf16.mxu0 0
      %511 = vmatpush1.bf16.msra.mxu0 %v337
      %512 = vmatprep.subr.bf16.mxu0 0
      %513 = vmatpush1.bf16.msra.mxu0 %v328
      %514 = vmatprep.subr.bf16.mxu0 0
      %515 = vmatpush2.bf16.msra.mxu0 0
      %516 = vmatprep.subr.bf16.mxu0 0
      %517 = vmatpush2.bf16.msra.mxu0 0
      %518 = vmatprep.subr.bf16.mxu0 0
      %519 = vmatpush2.bf16.msra.mxu0 0
      %520 = vmatprep.subr.bf16.mxu0 0
      %521 = vmatpush2.bf16.msra.mxu0 0
      %522 = vmatprep.subr.bf16.mxu0 0
      %523 = vmatpush2.bf16.msra.mxu0 0
      %524 = vmatprep.subr.bf16.mxu0 0
      %525 = vmatpush2.bf16.msra.mxu0 0
      %526 = vmatprep.subr.bf16.mxu0 0
      %527 = vmatpush2.bf16.msra.mxu0 0
      %528 = vmatprep.subr.bf16.mxu0 0
      %529 = vmatpush2.bf16.msra.mxu0 %v421
      %530 = vmatprep.mubr.bf16.mxu0 %v453
      %531 = vmatmul.mubr.bf16.gmra.mxu0 %v448
      %v532 = vpop.f32.mrf.mxu0
      %v533 = vadd.f32 %v435, %v532
      %v534 = vpop.f32.mrf.mxu0
      %v535 = vpop.f32.mrf.mxu0
      %v536 = vadd.f32 %v440, %v535
      %v537 = vpop.f32.mrf.mxu0
      %538 = vdwg.mxu0
      %v539 = vmax.f32 %v490, 0.0
      %v540 = vmax.f32 %v492, 0.0
      %v541 = vmax.f32 %v533, 0.0
      %v543 = vlaneseq
      %v544 = vshrl.u32 %v543, 7
      %v545 = vsub.s32 0, %v544
      %v546 = vrot.slane %v311, %v545
      %v547 = vlaneseq
      %v548 = vshrl.u32 %v547, 7
      %v549 = vsub.s32 1, %v548
      %v550 = vrot.slane %v311, %v549
      %v551 = vlaneseq
      %v552 = vshrl.u32 %v551, 7
      %v553 = vsub.s32 2, %v552
      %v554 = vrot.slane %v311, %v553
      %v558 = vmul.f32 %v539, %v546
      %v559 = vmul.f32 %v540, %v550
      %v560 = vmul.f32 %v541, %v554
      %564 = vrot.lane.b32.xlu0 %v558, 19
      %v565 = vpop.permute.xlu0 %564
      %566 = vrot.lane.b32.xlu0 %v559, 19
      %v567 = vpop.permute.xlu0 %566
      %568 = vrot.lane.b32.xlu0 %v560, 19
      %v569 = vpop.permute.xlu0 %568
      %v570 = vsel %vm307, %v565, %v567
      %v571 = vsel %vm307, %v567, %v569
      %vm575 = vcmask 1047704
      %576 = vst.msk [vmem:[#allocation2] sm:$0xff] %vm575, %v565
      %577 = vst [vmem:[#allocation2 + $0x8] sm:$0xff] %v570
      %vm578 = vcmask 416768
      %579 = vst.msk [vmem:[#allocation2 + $0x10] sm:$0xff] %vm578, %v571
      %v580 = vld [vmem:[#allocation2] sm:$0xff]
      %v581 = vld [vmem:[#allocation2 + $0x8] sm:$0xff]
      %v582 = vld [vmem:[#allocation2 + $0x10] sm:$0xff]
      %586 = vrot.lane.b32.xlu0 %v580, 127
      %v587 = vpop.permute.xlu0 %586
      %588 = vrot.lane.b32.xlu0 %v581, 127
      %v589 = vpop.permute.xlu0 %588
      %590 = vrot.lane.b32.xlu0 %v582, 127
      %v591 = vpop.permute.xlu0 %590
      %vm592 = vcmask 1039360
      %v593 = vsel %vm592, %v587, %v589
      %v594 = vsel %vm592, %v589, %v591
      %598 = vrot.lane.b32.xlu0 %v580, 126
      %v599 = vpop.permute.xlu0 %598
      %600 = vrot.lane.b32.xlu0 %v581, 126
      %v601 = vpop.permute.xlu0 %600
      %602 = vrot.lane.b32.xlu0 %v582, 126
      %v603 = vpop.permute.xlu0 %602
      %vm604 = vcmask 1031168
      %v605 = vsel %vm604, %v599, %v601
      %v606 = vsel %vm604, %v601, %v603
      %610 = vrot.lane.b32.xlu0 %v580, 110
      %v611 = vpop.permute.xlu0 %610
      %612 = vrot.lane.b32.xlu0 %v581, 110
      %v613 = vpop.permute.xlu0 %612
      %614 = vrot.lane.b32.xlu0 %v582, 110
      %v615 = vpop.permute.xlu0 %614
      %vm616 = vcmask 900096
      %v617 = vsel %vm616, %v611, %v613
      %v618 = vsel %vm616, %v613, %v615
      %622 = vrot.lane.b32.xlu0 %v580, 109
      %v623 = vpop.permute.xlu0 %622
      %624 = vrot.lane.b32.xlu0 %v581, 109
      %v625 = vpop.permute.xlu0 %624
      %626 = vrot.lane.b32.xlu0 %v582, 109
      %v627 = vpop.permute.xlu0 %626
      %vm628 = vcmask 891904
      %v629 = vsel %vm628, %v623, %v625
      %v630 = vsel %vm628, %v625, %v627
      %634 = vrot.lane.b32.xlu0 %v580, 108
      %v635 = vpop.permute.xlu0 %634
      %636 = vrot.lane.b32.xlu0 %v581, 108
      %v637 = vpop.permute.xlu0 %636
      %638 = vrot.lane.b32.xlu0 %v582, 108
      %v639 = vpop.permute.xlu0 %638
      %vm640 = vcmask 883712
      %v641 = vsel %vm640, %v635, %v637
      %v642 = vsel %vm640, %v637, %v639
      %646 = vrot.lane.b32.xlu0 %v580, 92
      %v647 = vpop.permute.xlu0 %646
      %648 = vrot.lane.b32.xlu0 %v581, 92
      %v649 = vpop.permute.xlu0 %648
      %650 = vrot.lane.b32.xlu0 %v582, 92
      %v651 = vpop.permute.xlu0 %650
      %vm652 = vcmask 752640
      %v653 = vsel %vm652, %v647, %v649
      %v654 = vsel %vm652, %v649, %v651
      %658 = vrot.lane.b32.xlu0 %v580, 91
      %v659 = vpop.permute.xlu0 %658
      %660 = vrot.lane.b32.xlu0 %v581, 91
      %v661 = vpop.permute.xlu0 %660
      %662 = vrot.lane.b32.xlu0 %v582, 91
      %v663 = vpop.permute.xlu0 %662
      %vm664 = vcmask 744448
      %v665 = vsel %vm664, %v659, %v661
      %v666 = vsel %vm664, %v661, %v663
      %670 = vrot.lane.b32.xlu0 %v580, 90
      %v671 = vpop.permute.xlu0 %670
      %672 = vrot.lane.b32.xlu0 %v581, 90
      %v673 = vpop.permute.xlu0 %672
      %674 = vrot.lane.b32.xlu0 %v582, 90
      %v675 = vpop.permute.xlu0 %674
      %vm676 = vcmask 736256
      %v677 = vsel %vm676, %v671, %v673
      %v678 = vsel %vm676, %v673, %v675
      %v682 = vpack.c.bf16 %v593, %v580
      %v683 = vpack.c.bf16 %v594, %v581
      %v684 = vpack.c.bf16 %v591, %v582
      %v685 = vpack.c.bf16 %v617, %v605
      %v686 = vpack.c.bf16 %v618, %v606
      %v687 = vpack.c.bf16 %v615, %v603
      %v688 = vpack.c.bf16 %v641, %v629
      %v689 = vpack.c.bf16 %v642, %v630
      %v690 = vpack.c.bf16 %v639, %v627
      %v691 = vpack.c.bf16 %v665, %v653
      %v692 = vpack.c.bf16 %v666, %v654
      %v693 = vpack.c.bf16 %v663, %v651
      %v694 = vpack.c.bf16 %v677, %v677
      %v695 = vpack.c.bf16 %v678, %v678
      %v696 = vpack.c.bf16 %v675, %v675
      %v697 = vld [vmem:[%s3] sm:$0xf]
      %v698 = vld [vmem:[%s4] sm:$0xff]
      %700 = vset.pattern.permute.xlu0 0
      %701 = vperm.xlu0 %700, %v698
      %v702 = vpop.permute.xlu0 %701
      %vm704 = vcmask 588800
      %v706 = vsel %vm704, %v697, 0
      %vm708 = vcmask 1043456
      %v710 = vsel %vm708, %v694, 0
      %v713 = vsel %vm708, %v695, 0
      %v716 = vsel %vm708, %v696, 0
      %718 = vmatprep.subr.bf16.mxu0 0
      %719 = vmatpush1.bf16.msra.mxu0 0
      %720 = vmatprep.subr.bf16.mxu0 0
      %721 = vmatpush1.bf16.msra.mxu0 0
      %722 = vmatprep.subr.bf16.mxu0 0
      %723 = vmatpush1.bf16.msra.mxu0 0
      %724 = vmatprep.subr.bf16.mxu0 %v713
      %725 = vmatpush1.bf16.msra.mxu0 %v710
      %726 = vmatprep.subr.bf16.mxu0 %v692
      %727 = vmatpush1.bf16.msra.mxu0 %v691
      %728 = vmatprep.subr.bf16.mxu0 %v689
      %729 = vmatpush1.bf16.msra.mxu0 %v688
      %730 = vmatprep.subr.bf16.mxu0 %v686
      %731 = vmatpush1.bf16.msra.mxu0 %v685
      %732 = vmatprep.subr.bf16.mxu0 %v683
      %733 = vmatpush1.bf16.msra.mxu0 %v682
      %734 = vmatprep.subr.bf16.mxu0 0
      %735 = vmatpush2.bf16.msra.mxu0 0
      %736 = vmatprep.subr.bf16.mxu0 0
      %737 = vmatpush2.bf16.msra.mxu0 0
      %738 = vmatprep.subr.bf16.mxu0 0
      %739 = vmatpush2.bf16.msra.mxu0 0
      %740 = vmatprep.subr.bf16.mxu0 0
      %741 = vmatpush2.bf16.msra.mxu0 0
      %742 = vmatprep.subr.bf16.mxu0 0
      %743 = vmatpush2.bf16.msra.mxu0 0
      %744 = vmatprep.subr.bf16.mxu0 0
      %745 = vmatpush2.bf16.msra.mxu0 0
      %746 = vmatprep.subr.bf16.mxu0 0
      %747 = vmatpush2.bf16.msra.mxu0 0
      %748 = vmatprep.subr.bf16.mxu0 0
      %749 = vmatpush2.bf16.msra.mxu0 0
      %750 = vmatprep.mubr.bf16.mxu0 0
      %751 = vmatmul.mubr.bf16.gmra.mxu0 %v706
      %v752 = vpop.f32.mrf.mxu0
      %v753 = vadd.f32 %v702, %v752
      %v754 = vpop.f32.mrf.mxu0
      %v755 = vadd.f32 %v702, %v754
      %v756 = vpop.f32.mrf.mxu0
      %v757 = vpop.f32.mrf.mxu0
      %758 = vdwg.mxu0
      %759 = vmatprep.subr.bf16.mxu0 0
      %760 = vmatpush1.bf16.msra.mxu0 0
      %761 = vmatprep.subr.bf16.mxu0 0
      %762 = vmatpush1.bf16.msra.mxu0 0
      %763 = vmatprep.subr.bf16.mxu0 0
      %764 = vmatpush1.bf16.msra.mxu0 0
      %765 = vmatprep.subr.bf16.mxu0 0
      %766 = vmatpush1.bf16.msra.mxu0 %v716
      %767 = vmatprep.subr.bf16.mxu0 0
      %768 = vmatpush1.bf16.msra.mxu0 %v693
      %769 = vmatprep.subr.bf16.mxu0 0
      %770 = vmatpush1.bf16.msra.mxu0 %v690
      %771 = vmatprep.subr.bf16.mxu0 0
      %772 = vmatpush1.bf16.msra.mxu0 %v687
      %773 = vmatprep.subr.bf16.mxu0 0
      %774 = vmatpush1.bf16.msra.mxu0 %v684
      %775 = vmatprep.subr.bf16.mxu0 0
      %776 = vmatpush2.bf16.msra.mxu0 0
      %777 = vmatprep.subr.bf16.mxu0 0
      %778 = vmatpush2.bf16.msra.mxu0 0
      %779 = vmatprep.subr.bf16.mxu0 0
      %780 = vmatpush2.bf16.msra.mxu0 0
      %781 = vmatprep.subr.bf16.mxu0 0
      %782 = vmatpush2.bf16.msra.mxu0 0
      %783 = vmatprep.subr.bf16.mxu0 0
      %784 = vmatpush2.bf16.msra.mxu0 0
      %785 = vmatprep.subr.bf16.mxu0 0
      %786 = vmatpush2.bf16.msra.mxu0 0
      %787 = vmatprep.subr.bf16.mxu0 0
      %788 = vmatpush2.bf16.msra.mxu0 0
      %789 = vmatprep.subr.bf16.mxu0 0
      %790 = vmatpush2.bf16.msra.mxu0 0
      %791 = vmatprep.mubr.bf16.mxu0 0
      %792 = vmatmul.mubr.bf16.gmra.mxu0 %v706
      %v793 = vpop.f32.mrf.mxu0
      %v794 = vadd.f32 %v702, %v793
      %v795 = vpop.f32.mrf.mxu0
      %v796 = vpop.f32.mrf.mxu0
      %v797 = vpop.f32.mrf.mxu0
      %798 = vdwg.mxu0
      %v799 = vmax.f32 %v753, 0.0
      %v800 = vmax.f32 %v755, 0.0
      %v801 = vmax.f32 %v794, 0.0
      %v802 = vmul.f32 %v799, %v546
      %v803 = vmul.f32 %v800, %v550
      %v804 = vmul.f32 %v801, %v554
      %808 = vrot.lane.b32.xlu0 %v802, 19
      %v809 = vpop.permute.xlu0 %808
      %810 = vrot.lane.b32.xlu0 %v803, 19
      %v811 = vpop.permute.xlu0 %810
      %812 = vrot.lane.b32.xlu0 %v804, 19
      %v813 = vpop.permute.xlu0 %812
      %v814 = vsel %vm307, %v809, %v811
      %v815 = vsel %vm307, %v811, %v813
      %819 = vst.msk [vmem:[#allocation2] sm:$0xff] %vm575, %v809
      %820 = vst [vmem:[#allocation2 + $0x8] sm:$0xff] %v814
      %821 = vst.msk [vmem:[#allocation2 + $0x10] sm:$0xff] %vm578, %v815
      %v822 = vld [vmem:[#allocation2] sm:$0xff]
      %v823 = vld [vmem:[#allocation2 + $0x8] sm:$0xff]
      %v824 = vld [vmem:[#allocation2 + $0x10] sm:$0xff]
      %828 = vrot.lane.b32.xlu0 %v822, 127
      %v829 = vpop.permute.xlu0 %828
      %830 = vrot.lane.b32.xlu0 %v823, 127
      %v831 = vpop.permute.xlu0 %830
      %832 = vrot.lane.b32.xlu0 %v824, 127
      %v833 = vpop.permute.xlu0 %832
      %v834 = vsel %vm592, %v829, %v831
      %v835 = vsel %vm592, %v831, %v833
      %839 = vrot.lane.b32.xlu0 %v822, 126
      %v840 = vpop.permute.xlu0 %839
      %841 = vrot.lane.b32.xlu0 %v823, 126
      %v842 = vpop.permute.xlu0 %841
      %843 = vrot.lane.b32.xlu0 %v824, 126
      %v844 = vpop.permute.xlu0 %843
      %v845 = vsel %vm604, %v840, %v842
      %v846 = vsel %vm604, %v842, %v844
      %850 = vrot.lane.b32.xlu0 %v822, 110
      %v851 = vpop.permute.xlu0 %850
      %852 = vrot.lane.b32.xlu0 %v823, 110
      %v853 = vpop.permute.xlu0 %852
      %854 = vrot.lane.b32.xlu0 %v824, 110
      %v855 = vpop.permute.xlu0 %854
      %v856 = vsel %vm616, %v851, %v853
      %v857 = vsel %vm616, %v853, %v855
      %861 = vrot.lane.b32.xlu0 %v822, 109
      %v862 = vpop.permute.xlu0 %861
      %863 = vrot.lane.b32.xlu0 %v823, 109
      %v864 = vpop.permute.xlu0 %863
      %865 = vrot.lane.b32.xlu0 %v824, 109
      %v866 = vpop.permute.xlu0 %865
      %v867 = vsel %vm628, %v862, %v864
      %v868 = vsel %vm628, %v864, %v866
      %872 = vrot.lane.b32.xlu0 %v822, 108
      %v873 = vpop.permute.xlu0 %872
      %874 = vrot.lane.b32.xlu0 %v823, 108
      %v875 = vpop.permute.xlu0 %874
      %876 = vrot.lane.b32.xlu0 %v824, 108
      %v877 = vpop.permute.xlu0 %876
      %v878 = vsel %vm640, %v873, %v875
      %v879 = vsel %vm640, %v875, %v877
      %883 = vrot.lane.b32.xlu0 %v822, 92
      %v884 = vpop.permute.xlu0 %883
      %885 = vrot.lane.b32.xlu0 %v823, 92
      %v886 = vpop.permute.xlu0 %885
      %887 = vrot.lane.b32.xlu0 %v824, 92
      %v888 = vpop.permute.xlu0 %887
      %v889 = vsel %vm652, %v884, %v886
      %v890 = vsel %vm652, %v886, %v888
      %894 = vrot.lane.b32.xlu0 %v822, 91
      %v895 = vpop.permute.xlu0 %894
      %896 = vrot.lane.b32.xlu0 %v823, 91
      %v897 = vpop.permute.xlu0 %896
      %898 = vrot.lane.b32.xlu0 %v824, 91
      %v899 = vpop.permute.xlu0 %898
      %v900 = vsel %vm664, %v895, %v897
      %v901 = vsel %vm664, %v897, %v899
      %905 = vrot.lane.b32.xlu0 %v822, 90
      %v906 = vpop.permute.xlu0 %905
      %907 = vrot.lane.b32.xlu0 %v823, 90
      %v908 = vpop.permute.xlu0 %907
      %909 = vrot.lane.b32.xlu0 %v824, 90
      %v910 = vpop.permute.xlu0 %909
      %v911 = vsel %vm676, %v906, %v908
      %v912 = vsel %vm676, %v908, %v910
      %v916 = vpack.c.bf16 %v834, %v822
      %v917 = vpack.c.bf16 %v835, %v823
      %v918 = vpack.c.bf16 %v833, %v824
      %v919 = vpack.c.bf16 %v856, %v845
      %v920 = vpack.c.bf16 %v857, %v846
      %v921 = vpack.c.bf16 %v855, %v844
      %v922 = vpack.c.bf16 %v878, %v867
      %v923 = vpack.c.bf16 %v879, %v868
      %v924 = vpack.c.bf16 %v877, %v866
      %v925 = vpack.c.bf16 %v900, %v889
      %v926 = vpack.c.bf16 %v901, %v890
      %v927 = vpack.c.bf16 %v899, %v888
      %v928 = vpack.c.bf16 %v911, %v911
      %v929 = vpack.c.bf16 %v912, %v912
      %v930 = vpack.c.bf16 %v910, %v910
      %v931 = vld [vmem:[%s5] sm:$0xf]
      %v932 = vld [vmem:[%s6] sm:$0xff]
      %934 = vset.pattern.permute.xlu0 0
      %935 = vperm.xlu0 %934, %v932
      %v936 = vpop.permute.xlu0 %935
      %v939 = vsel %vm704, %v931, 0
      %v942 = vsel %vm708, %v928, 0
      %v945 = vsel %vm708, %v929, 0
      %v948 = vsel %vm708, %v930, 0
      %950 = vmatprep.subr.bf16.mxu0 0
      %951 = vmatpush1.bf16.msra.mxu0 0
      %952 = vmatprep.subr.bf16.mxu0 0
      %953 = vmatpush1.bf16.msra.mxu0 0
      %954 = vmatprep.subr.bf16.mxu0 0
      %955 = vmatpush1.bf16.msra.mxu0 0
      %956 = vmatprep.subr.bf16.mxu0 %v945
      %957 = vmatpush1.bf16.msra.mxu0 %v942
      %958 = vmatprep.subr.bf16.mxu0 %v926
      %959 = vmatpush1.bf16.msra.mxu0 %v925
      %960 = vmatprep.subr.bf16.mxu0 %v923
      %961 = vmatpush1.bf16.msra.mxu0 %v922
      %962 = vmatprep.subr.bf16.mxu0 %v920
      %963 = vmatpush1.bf16.msra.mxu0 %v919
      %964 = vmatprep.subr.bf16.mxu0 %v917
      %965 = vmatpush1.bf16.msra.mxu0 %v916
      %966 = vmatprep.subr.bf16.mxu0 0
      %967 = vmatpush2.bf16.msra.mxu0 0
      %968 = vmatprep.subr.bf16.mxu0 0
      %969 = vmatpush2.bf16.msra.mxu0 0
      %970 = vmatprep.subr.bf16.mxu0 0
      %971 = vmatpush2.bf16.msra.mxu0 0
      %972 = vmatprep.subr.bf16.mxu0 0
      %973 = vmatpush2.bf16.msra.mxu0 0
      %974 = vmatprep.subr.bf16.mxu0 0
      %975 = vmatpush2.bf16.msra.mxu0 0
      %976 = vmatprep.subr.bf16.mxu0 0
      %977 = vmatpush2.bf16.msra.mxu0 0
      %978 = vmatprep.subr.bf16.mxu0 0
      %979 = vmatpush2.bf16.msra.mxu0 0
      %980 = vmatprep.subr.bf16.mxu0 0
      %981 = vmatpush2.bf16.msra.mxu0 0
      %982 = vmatprep.mubr.bf16.mxu0 0
      %983 = vmatmul.mubr.bf16.gmra.mxu0 %v939
      %v984 = vpop.f32.mrf.mxu0
      %v985 = vadd.f32 %v936, %v984
      %v986 = vpop.f32.mrf.mxu0
      %v987 = vadd.f32 %v936, %v986
      %v988 = vpop.f32.mrf.mxu0
      %v989 = vpop.f32.mrf.mxu0
      %990 = vdwg.mxu0
      %991 = vmatprep.subr.bf16.mxu0 0
      %992 = vmatpush1.bf16.msra.mxu0 0
      %993 = vmatprep.subr.bf16.mxu0 0
      %994 = vmatpush1.bf16.msra.mxu0 0
      %995 = vmatprep.subr.bf16.mxu0 0
      %996 = vmatpush1.bf16.msra.mxu0 0
      %997 = vmatprep.subr.bf16.mxu0 0
      %998 = vmatpush1.bf16.msra.mxu0 %v948
      %999 = vmatprep.subr.bf16.mxu0 0
      %1000 = vmatpush1.bf16.msra.mxu0 %v927
      %1001 = vmatprep.subr.bf16.mxu0 0
      %1002 = vmatpush1.bf16.msra.mxu0 %v924
      %1003 = vmatprep.subr.bf16.mxu0 0
      %1004 = vmatpush1.bf16.msra.mxu0 %v921
      %1005 = vmatprep.subr.bf16.mxu0 0
      %1006 = vmatpush1.bf16.msra.mxu0 %v918
      %1007 = vmatprep.subr.bf16.mxu0 0
      %1008 = vmatpush2.bf16.msra.mxu0 0
      %1009 = vmatprep.subr.bf16.mxu0 0
      %1010 = vmatpush2.bf16.msra.mxu0 0
      %1011 = vmatprep.subr.bf16.mxu0 0
      %1012 = vmatpush2.bf16.msra.mxu0 0
      %1013 = vmatprep.subr.bf16.mxu0 0
      %1014 = vmatpush2.bf16.msra.mxu0 0
      %1015 = vmatprep.subr.bf16.mxu0 0
      %1016 = vmatpush2.bf16.msra.mxu0 0
      %1017 = vmatprep.subr.bf16.mxu0 0
      %1018 = vmatpush2.bf16.msra.mxu0 0
      %1019 = vmatprep.subr.bf16.mxu0 0
      %1020 = vmatpush2.bf16.msra.mxu0 0
      %1021 = vmatprep.subr.bf16.mxu0 0
      %1022 = vmatpush2.bf16.msra.mxu0 0
      %1023 = vmatprep.mubr.bf16.mxu0 0
      %1024 = vmatmul.mubr.bf16.gmra.mxu0 %v939
      %v1025 = vpop.f32.mrf.mxu0
      %v1026 = vadd.f32 %v936, %v1025
      %v1027 = vpop.f32.mrf.mxu0
      %v1028 = vpop.f32.mrf.mxu0
      %v1029 = vpop.f32.mrf.mxu0
      %1030 = vdwg.mxu0
      %v1031 = vadd.f32 %v985, %v494
      %v1032 = vadd.f32 %v987, %v496
      %v1033 = vadd.f32 %v1026, %v536
      %v1034 = vmax.f32 %v1031, 0.0
      %v1035 = vmax.f32 %v1032, 0.0
      %v1036 = vmax.f32 %v1033, 0.0
      %1037 = vst [vmem:[%s305] sm:$0xff] %v1034
      %1038 = vst [vmem:[%s305 + $0x8] sm:$0xff] %v1035
      %vm1039 = vcmask 261120
      %1040 = vst.msk [vmem:[%s305 + $0x10] sm:$0xff] %vm1039, %v1036
      %p1041 = scmp.lt.s32.totalorder %s19, 1
      %s1042 = scalar_select %p1041, %s19, 1
      %s1043 = smul.addr %s1042, 3
      %s1044 = smul.addr %s1043, 8
      %s1045 = scalar_lea.vmem %s8, %s1044
      // Predicated region
      $region53: #{up_forward.1} parent=51 // pred_check
        %p1046 = pneg %p210
      $region54: #{up_forward.1} parent=51 // pred_check_branch
        %1048 = sbr.rel (%p1046) target = $region56
      $region55: #{up_forward.1} parent=51 // pred_region
        _
      $region56: #{up_forward.1} parent=51 // pred_fallthru
        _
    $region52: #{up_forward.1} parent=5 // pred_fallthru
      _
    %p1049 = scmp.le.s32.totalorder 2, %s14
    // Predicated region
    $region57: #{up_forward.1} parent=5 // pred_check
      %p1050 = pneg %p1049
    $region58: #{up_forward.1} parent=5 // pred_check_branch
      %1052 = sbr.rel (%p1050) target = $region60
    $region59: #{up_forward.1} parent=5 // pred_region
      %s1053 = ssub.s32 %s14, 2
      // Predicated region
      $region61: #{up_forward.1} parent=59 // pred_check
        %p1054 = pneg %p216
      $region62: #{up_forward.1} parent=59 // pred_check_branch
        %1056 = sbr.rel (%p1054) target = $region64
      $region63: #{up_forward.1} parent=59 // pred_region
        %p1057 = scmp.lt.s32.totalorder %s20, 1
        %s1058 = scalar_select %p1057, %s20, 1
        %s1059 = smul.addr %s1058, 3
        %s1060 = smul.addr %s1059, 8
        %s1061 = scalar_lea.vmem %s8, %s1060
      $region64: #{up_forward.1} parent=59 // pred_fallthru
        _
    $region60: #{up_forward.1} parent=5 // pred_fallthru
      _
  $region6: #{up_forward.1} parent=0 // loop_footer
    %s18 = sadd.s32 1, %s14
  $region7: #{up_forward.1} parent=0 // loop_footer_branch
    %13 = sbr.rel target = $region3
  $region8: #{up_forward.1} parent=0 // loop_exit
    _

</llo_original>
